<compile_context>
chip_gen: v7x
topology: tpu7x:2x2x1
jax: 0.10.0
libtpu: 0.0.40
codegen_flags: <defaults>
</compile_context>

<pallas_src>
import jax
import jax.numpy as jnp
from jax.experimental import pallas as pl
from jax.experimental.pallas import tpu as pltpu

HIDDEN = 128
OUT = 6
SUBLANE = 8


def rnn_recurrence_kernel(xp_ref, whh_ref, h_out_ref, h_scratch):
    """One time-chunk of the recurrence.

    xp_ref:    (TT, Bp, H)  precomputed x_t @ W_ih^T + b_ih + b_hh
    whh_ref:   (H, H)       W_hh^T (resident across the whole grid)
    h_out_ref: (TT, Bp, H)  hidden states for this chunk (lane-dense output)
    h_scratch: (Bp, H)      hidden state carried across grid steps
    """
    # PyTorch default: h0 = zeros.
    @pl.when(pl.program_id(0) == 0)
    def _():
        h_scratch[...] = jnp.zeros_like(h_scratch)

    whh = whh_ref[...]
    tt = xp_ref.shape[0]

    def step(i, h):
        h_new = jnp.tanh(
            xp_ref[i]
            + jnp.dot(h, whh, preferred_element_type=jnp.float32))
        h_out_ref[i] = h_new
        return h_new

    # unroll=True: short fixed trip count, let the LLO scheduler interleave.
    h_final = jax.lax.fori_loop(0, tt, step, h_scratch[...], unroll=True)
    h_scratch[...] = h_final


def trade_rnn_forward(x, w_ih, w_hh, b_ih, b_hh, w_fc, b_fc, *, time_chunk=32):
    """x: (B, T, D) float32 (batch_first, like the PyTorch module). Returns (B, T, 6)."""
    B, T, D = x.shape
    x = x.astype(jnp.float32)

    # Pad batch to a full sublane group (>= 8 rows). The recurrence never
    # mixes batch rows, so padded rows are harmless and sliced off at the end.
    Bp = ((B + SUBLANE - 1) // SUBLANE) * SUBLANE
    if Bp != B:
        x = jnp.pad(x, ((0, Bp - B), (0, 0), (0, 0)))

    # Time chunking: TT timesteps per grid step.
    TT = min(time_chunk, T)
    Tp = ((T + TT - 1) // TT) * TT

    # Hoisted input projection (no time dependence): one big matmul with the
    # combined bias folded in, produced time-major so the recurrent kernel can
    # index the leading axis per step.
    b_comb = (b_ih + b_hh).astype(jnp.float32)
    x_proj = jnp.einsum('btd,hd->tbh', x, w_ih.astype(jnp.float32)) + b_comb
    if Tp != T:
        x_proj = jnp.pad(x_proj, ((0, Tp - T), (0, 0), (0, 0)))

    whh_t = w_hh.astype(jnp.float32).T  # (H, H)

    hs = pl.pallas_call(
        rnn_recurrence_kernel,
        out_shape=jax.ShapeDtypeStruct((Tp, Bp, HIDDEN), jnp.float32),
        grid=(Tp // TT,),
        in_specs=[
            pl.BlockSpec((TT, Bp, HIDDEN), lambda t: (t, 0, 0)),   # x_proj chunk
            pl.BlockSpec((HIDDEN, HIDDEN), lambda t: (0, 0)),      # W_hh^T (resident)
        ],
        out_specs=pl.BlockSpec((TT, Bp, HIDDEN), lambda t: (t, 0, 0)),
        scratch_shapes=[pltpu.VMEM((Bp, HIDDEN), jnp.float32)],
        compiler_params=pltpu.CompilerParams(
            # Recurrence over time: must stay sequential.
            dimension_semantics=("arbitrary",),
        ),
    )(x_proj, whh_t)

    # fc (Linear(128, 6) + Tanh) over all timesteps in one big matmul, outside
    # the kernel so the kernel output stays lane-dense (128 wide).
    hs = hs[:T, :B, :]                                            # (T, B, H)
    out = jnp.tanh(jnp.einsum('tbh,oh->bto', hs,
                              w_fc.astype(jnp.float32)) + b_fc)   # (B, T, OUT)
    return out


def trade_rnn_reference(x, w_ih, w_hh, b_ih, b_hh, w_fc, b_fc):
    """Pure-JAX reference matching PyTorch nn.RNN (tanh) + Linear + Tanh."""
    B, T, D = x.shape

    def step(h, x_t):
        h_new = jnp.tanh(x_t @ w_ih.T + b_ih + h @ w_hh.T + b_hh)
        return h_new, h_new

    h0 = jnp.zeros((B, HIDDEN), jnp.float32)
    _, hs = jax.lax.scan(step, h0, jnp.transpose(x, (1, 0, 2)))   # (T, B, H)
    o = jnp.transpose(hs, (1, 0, 2))                              # (B, T, H)
    return jnp.tanh(o @ w_fc.T + b_fc)


if __name__ == "__main__":
    B, T, D = 2, 8, 16  # batch=2, seq=8, input_size=16

    key = jax.random.PRNGKey(0)
    ks = jax.random.split(key, 7)
    bound = 1.0 / jnp.sqrt(HIDDEN)

    x = jax.random.normal(ks[0], (B, T, D), jnp.float32)
    w_ih = jax.random.uniform(ks[1], (HIDDEN, D), jnp.float32, -bound, bound)
    w_hh = jax.random.uniform(ks[2], (HIDDEN, HIDDEN), jnp.float32, -bound, bound)
    b_ih = jax.random.uniform(ks[3], (HIDDEN,), jnp.float32, -bound, bound)
    b_hh = jax.random.uniform(ks[4], (HIDDEN,), jnp.float32, -bound, bound)
    w_fc = jax.random.uniform(ks[5], (OUT, HIDDEN), jnp.float32, -bound, bound)
    b_fc = jax.random.uniform(ks[6], (OUT,), jnp.float32, -bound, bound)

    out = trade_rnn_forward(x, w_ih, w_hh, b_ih, b_hh, w_fc, b_fc)
    out = jax.block_until_ready(out)

    ref = trade_rnn_reference(x, w_ih, w_hh, b_ih, b_hh, w_fc, b_fc)
    assert out.shape == (B, T, OUT), out.shape
    assert jnp.allclose(out, ref, atol=2e-5, rtol=2e-5), \
        float(jnp.max(jnp.abs(out - ref)))

    print("KERNEL_OK")
</pallas_src>

<mosaic_0001>
module attributes {stable_mosaic.version = 11 : i64} {
  func.func @rnn_recurrence_kernel(%arg0: i32, %arg1: memref<8x8x128xf32, #tpu.memory_space<vmem>>, %arg2: memref<128x128xf32, #tpu.memory_space<vmem>>, %arg3: memref<8x8x128xf32, #tpu.memory_space<vmem>>, %arg4: memref<8x128xf32, #tpu.memory_space<vmem>>) attributes {dimension_semantics = [#tpu.dimension_semantics<arbitrary>], iteration_bounds = array<i64: 1>, scalar_prefetch = 0 : i64, scratch_operands = 1 : i64, tpu.core_type = #tpu.core_type<tc>, window_params = [{transform_indices = @transform_0, window_bounds = array<i64: 8, 8, 128>}, {pipeline_mode = #tpu.pipeline_mode<synchronous>, transform_indices = @transform_1, window_bounds = array<i64: 128, 128>}, {transform_indices = @transform_2, window_bounds = array<i64: 8, 8, 128>}]} {
    %c0_i32 = arith.constant 0 : i32
    %0 = arith.cmpi eq, %arg0, %c0_i32 : i32
    %1 = arith.extui %0 : i1 to i32
    %c0_i32_0 = arith.constant 0 : i32
    %2 = arith.cmpi ne, %1, %c0_i32_0 : i32
    scf.if %2 {
      %cst_46 = arith.constant 0.000000e+00 : f32
      %86 = vector.broadcast %cst_46 : f32 to vector<8x128xf32>
      %c0_47 = arith.constant 0 : index
      %c0_48 = arith.constant 0 : index
      %87 = vector.load %arg4[%c0_47, %c0_48] : memref<8x128xf32, #tpu.memory_space<vmem>>, vector<8x128xf32>
      tpu.vector_store %arg4[%c0_47, %c0_48], %86 {strides = array<i32>} : memref<8x128xf32, #tpu.memory_space<vmem>>, vector<8x128xf32>,
    } else {
    }
    %c0 = arith.constant 0 : index
    %c0_1 = arith.constant 0 : index
    %3 = vector.load %arg2[%c0, %c0_1] : memref<128x128xf32, #tpu.memory_space<vmem>>, vector<128x128xf32>
    %c0_2 = arith.constant 0 : index
    %c0_3 = arith.constant 0 : index
    %4 = vector.load %arg4[%c0_2, %c0_3] : memref<8x128xf32, #tpu.memory_space<vmem>>, vector<8x128xf32>
    %c0_i32_4 = arith.constant 0 : i32
    %5 = arith.index_cast %c0_i32_4 : i32 to index
    %c0_5 = arith.constant 0 : index
    %c0_6 = arith.constant 0 : index
    %6 = vector.load %arg1[%5, %c0_5, %c0_6] : memref<8x8x128xf32, #tpu.memory_space<vmem>>, vector<1x8x128xf32>
    %7 = vector.shape_cast %6 : vector<1x8x128xf32> to vector<8x128xf32>
    %cst = arith.constant dense<0.000000e+00> : vector<8x128xf32>
    %8 = tpu.matmul %4, %3, %cst {dimension_numbers = #tpu.dot_dimension_numbers<[1], [0], [0], [1], [0, 0, 1, 1], [], []>} : vector<8x128xf32>, vector<128x128xf32>, vector<8x128xf32> -> vector<8x128xf32>
    %9 = arith.addf %7, %8 : vector<8x128xf32>
    %10 = math.tanh %9 : vector<8x128xf32>
    %11 = arith.index_cast %c0_i32_4 : i32 to index
    %c0_7 = arith.constant 0 : index
    %c0_8 = arith.constant 0 : index
    %12 = vector.load %arg3[%11, %c0_7, %c0_8] : memref<8x8x128xf32, #tpu.memory_space<vmem>>, vector<1x8x128xf32>
    %13 = vector.shape_cast %12 : vector<1x8x128xf32> to vector<8x128xf32>
    %14 = vector.shape_cast %10 : vector<8x128xf32> to vector<1x8x128xf32>
    tpu.vector_store %arg3[%11, %c0_7, %c0_8], %14 {strides = array<i32>} : memref<8x8x128xf32, #tpu.memory_space<vmem>>, vector<1x8x128xf32>,
    %c1_i32 = arith.constant 1 : i32
    %15 = arith.index_cast %c1_i32 : i32 to index
    %c0_9 = arith.constant 0 : index
    %c0_10 = arith.constant 0 : index
    %16 = vector.load %arg1[%15, %c0_9, %c0_10] : memref<8x8x128xf32, #tpu.memory_space<vmem>>, vector<1x8x128xf32>
    %17 = vector.shape_cast %16 : vector<1x8x128xf32> to vector<8x128xf32>
    %cst_11 = arith.constant dense<0.000000e+00> : vector<8x128xf32>
    %18 = tpu.matmul %10, %3, %cst_11 {dimension_numbers = #tpu.dot_dimension_numbers<[1], [0], [0], [1], [0, 0, 1, 1], [], []>} : vector<8x128xf32>, vector<128x128xf32>, vector<8x128xf32> -> vector<8x128xf32>
    %19 = arith.addf %17, %18 : vector<8x128xf32>
    %20 = math.tanh %19 : vector<8x128xf32>
    %21 = arith.index_cast %c1_i32 : i32 to index
    %c0_12 = arith.constant 0 : index
    %c0_13 = arith.constant 0 : index
    %22 = vector.load %arg3[%21, %c0_12, %c0_13] : memref<8x8x128xf32, #tpu.memory_space<vmem>>, vector<1x8x128xf32>
    %23 = vector.shape_cast %22 : vector<1x8x128xf32> to vector<8x128xf32>
    %24 = vector.shape_cast %20 : vector<8x128xf32> to vector<1x8x128xf32>
    tpu.vector_store %arg3[%21, %c0_12, %c0_13], %24 {strides = array<i32>} : memref<8x8x128xf32, #tpu.memory_space<vmem>>, vector<1x8x128xf32>,
    %c2_i32 = arith.constant 2 : i32
    %25 = arith.index_cast %c2_i32 : i32 to index
    %c0_14 = arith.constant 0 : index
    %c0_15 = arith.constant 0 : index
    %26 = vector.load %arg1[%25, %c0_14, %c0_15] : memref<8x8x128xf32, #tpu.memory_space<vmem>>, vector<1x8x128xf32>
    %27 = vector.shape_cast %26 : vector<1x8x128xf32> to vector<8x128xf32>
    %cst_16 = arith.constant dense<0.000000e+00> : vector<8x128xf32>
    %28 = tpu.matmul %20, %3, %cst_16 {dimension_numbers = #tpu.dot_dimension_numbers<[1], [0], [0], [1], [0, 0, 1, 1], [], []>} : vector<8x128xf32>, vector<128x128xf32>, vector<8x128xf32> -> vector<8x128xf32>
    %29 = arith.addf %27, %28 : vector<8x128xf32>
    %30 = math.tanh %29 : vector<8x128xf32>
    %31 = arith.index_cast %c2_i32 : i32 to index
    %c0_17 = arith.constant 0 : index
    %c0_18 = arith.constant 0 : index
    %32 = vector.load %arg3[%31, %c0_17, %c0_18] : memref<8x8x128xf32, #tpu.memory_space<vmem>>, vector<1x8x128xf32>
    %33 = vector.shape_cast %32 : vector<1x8x128xf32> to vector<8x128xf32>
    %34 = vector.shape_cast %30 : vector<8x128xf32> to vector<1x8x128xf32>
    tpu.vector_store %arg3[%31, %c0_17, %c0_18], %34 {strides = array<i32>} : memref<8x8x128xf32, #tpu.memory_space<vmem>>, vector<1x8x128xf32>,
    %c3_i32 = arith.constant 3 : i32
    %35 = arith.index_cast %c3_i32 : i32 to index
    %c0_19 = arith.constant 0 : index
    %c0_20 = arith.constant 0 : index
    %36 = vector.load %arg1[%35, %c0_19, %c0_20] : memref<8x8x128xf32, #tpu.memory_space<vmem>>, vector<1x8x128xf32>
    %37 = vector.shape_cast %36 : vector<1x8x128xf32> to vector<8x128xf32>
    %cst_21 = arith.constant dense<0.000000e+00> : vector<8x128xf32>
    %38 = tpu.matmul %30, %3, %cst_21 {dimension_numbers = #tpu.dot_dimension_numbers<[1], [0], [0], [1], [0, 0, 1, 1], [], []>} : vector<8x128xf32>, vector<128x128xf32>, vector<8x128xf32> -> vector<8x128xf32>
    %39 = arith.addf %37, %38 : vector<8x128xf32>
    %40 = math.tanh %39 : vector<8x128xf32>
    %41 = arith.index_cast %c3_i32 : i32 to index
    %c0_22 = arith.constant 0 : index
    %c0_23 = arith.constant 0 : index
    %42 = vector.load %arg3[%41, %c0_22, %c0_23] : memref<8x8x128xf32, #tpu.memory_space<vmem>>, vector<1x8x128xf32>
    %43 = vector.shape_cast %42 : vector<1x8x128xf32> to vector<8x128xf32>
    %44 = vector.shape_cast %40 : vector<8x128xf32> to vector<1x8x128xf32>
    tpu.vector_store %arg3[%41, %c0_22, %c0_23], %44 {strides = array<i32>} : memref<8x8x128xf32, #tpu.memory_space<vmem>>, vector<1x8x128xf32>,
    %c4_i32 = arith.constant 4 : i32
    %45 = arith.index_cast %c4_i32 : i32 to index
    %c0_24 = arith.constant 0 : index
    %c0_25 = arith.constant 0 : index
    %46 = vector.load %arg1[%45, %c0_24, %c0_25] : memref<8x8x128xf32, #tpu.memory_space<vmem>>, vector<1x8x128xf32>
    %47 = vector.shape_cast %46 : vector<1x8x128xf32> to vector<8x128xf32>
    %cst_26 = arith.constant dense<0.000000e+00> : vector<8x128xf32>
    %48 = tpu.matmul %40, %3, %cst_26 {dimension_numbers = #tpu.dot_dimension_numbers<[1], [0], [0], [1], [0, 0, 1, 1], [], []>} : vector<8x128xf32>, vector<128x128xf32>, vector<8x128xf32> -> vector<8x128xf32>
    %49 = arith.addf %47, %48 : vector<8x128xf32>
    %50 = math.tanh %49 : vector<8x128xf32>
    %51 = arith.index_cast %c4_i32 : i32 to index
    %c0_27 = arith.constant 0 : index
    %c0_28 = arith.constant 0 : index
    %52 = vector.load %arg3[%51, %c0_27, %c0_28] : memref<8x8x128xf32, #tpu.memory_space<vmem>>, vector<1x8x128xf32>
    %53 = vector.shape_cast %52 : vector<1x8x128xf32> to vector<8x128xf32>
    %54 = vector.shape_cast %50 : vector<8x128xf32> to vector<1x8x128xf32>
    tpu.vector_store %arg3[%51, %c0_27, %c0_28], %54 {strides = array<i32>} : memref<8x8x128xf32, #tpu.memory_space<vmem>>, vector<1x8x128xf32>,
    %c5_i32 = arith.constant 5 : i32
    %55 = arith.index_cast %c5_i32 : i32 to index
    %c0_29 = arith.constant 0 : index
    %c0_30 = arith.constant 0 : index
    %56 = vector.load %arg1[%55, %c0_29, %c0_30] : memref<8x8x128xf32, #tpu.memory_space<vmem>>, vector<1x8x128xf32>
    %57 = vector.shape_cast %56 : vector<1x8x128xf32> to vector<8x128xf32>
    %cst_31 = arith.constant dense<0.000000e+00> : vector<8x128xf32>
    %58 = tpu.matmul %50, %3, %cst_31 {dimension_numbers = #tpu.dot_dimension_numbers<[1], [0], [0], [1], [0, 0, 1, 1], [], []>} : vector<8x128xf32>, vector<128x128xf32>, vector<8x128xf32> -> vector<8x128xf32>
    %59 = arith.addf %57, %58 : vector<8x128xf32>
    %60 = math.tanh %59 : vector<8x128xf32>
    %61 = arith.index_cast %c5_i32 : i32 to index
    %c0_32 = arith.constant 0 : index
    %c0_33 = arith.constant 0 : index
    %62 = vector.load %arg3[%61, %c0_32, %c0_33] : memref<8x8x128xf32, #tpu.memory_space<vmem>>, vector<1x8x128xf32>
    %63 = vector.shape_cast %62 : vector<1x8x128xf32> to vector<8x128xf32>
    %64 = vector.shape_cast %60 : vector<8x128xf32> to vector<1x8x128xf32>
    tpu.vector_store %arg3[%61, %c0_32, %c0_33], %64 {strides = array<i32>} : memref<8x8x128xf32, #tpu.memory_space<vmem>>, vector<1x8x128xf32>,
    %c6_i32 = arith.constant 6 : i32
    %65 = arith.index_cast %c6_i32 : i32 to index
    %c0_34 = arith.constant 0 : index
    %c0_35 = arith.constant 0 : index
    %66 = vector.load %arg1[%65, %c0_34, %c0_35] : memref<8x8x128xf32, #tpu.memory_space<vmem>>, vector<1x8x128xf32>
    %67 = vector.shape_cast %66 : vector<1x8x128xf32> to vector<8x128xf32>
    %cst_36 = arith.constant dense<0.000000e+00> : vector<8x128xf32>
    %68 = tpu.matmul %60, %3, %cst_36 {dimension_numbers = #tpu.dot_dimension_numbers<[1], [0], [0], [1], [0, 0, 1, 1], [], []>} : vector<8x128xf32>, vector<128x128xf32>, vector<8x128xf32> -> vector<8x128xf32>
    %69 = arith.addf %67, %68 : vector<8x128xf32>
    %70 = math.tanh %69 : vector<8x128xf32>
    %71 = arith.index_cast %c6_i32 : i32 to index
    %c0_37 = arith.constant 0 : index
    %c0_38 = arith.constant 0 : index
    %72 = vector.load %arg3[%71, %c0_37, %c0_38] : memref<8x8x128xf32, #tpu.memory_space<vmem>>, vector<1x8x128xf32>
    %73 = vector.shape_cast %72 : vector<1x8x128xf32> to vector<8x128xf32>
    %74 = vector.shape_cast %70 : vector<8x128xf32> to vector<1x8x128xf32>
    tpu.vector_store %arg3[%71, %c0_37, %c0_38], %74 {strides = array<i32>} : memref<8x8x128xf32, #tpu.memory_space<vmem>>, vector<1x8x128xf32>,
    %c7_i32 = arith.constant 7 : i32
    %75 = arith.index_cast %c7_i32 : i32 to index
    %c0_39 = arith.constant 0 : index
    %c0_40 = arith.constant 0 : index
    %76 = vector.load %arg1[%75, %c0_39, %c0_40] : memref<8x8x128xf32, #tpu.memory_space<vmem>>, vector<1x8x128xf32>
    %77 = vector.shape_cast %76 : vector<1x8x128xf32> to vector<8x128xf32>
    %cst_41 = arith.constant dense<0.000000e+00> : vector<8x128xf32>
    %78 = tpu.matmul %70, %3, %cst_41 {dimension_numbers = #tpu.dot_dimension_numbers<[1], [0], [0], [1], [0, 0, 1, 1], [], []>} : vector<8x128xf32>, vector<128x128xf32>, vector<8x128xf32> -> vector<8x128xf32>
    %79 = arith.addf %77, %78 : vector<8x128xf32>
    %80 = math.tanh %79 : vector<8x128xf32>
    %81 = arith.index_cast %c7_i32 : i32 to index
    %c0_42 = arith.constant 0 : index
    %c0_43 = arith.constant 0 : index
    %82 = vector.load %arg3[%81, %c0_42, %c0_43] : memref<8x8x128xf32, #tpu.memory_space<vmem>>, vector<1x8x128xf32>
    %83 = vector.shape_cast %82 : vector<1x8x128xf32> to vector<8x128xf32>
    %84 = vector.shape_cast %80 : vector<8x128xf32> to vector<1x8x128xf32>
    tpu.vector_store %arg3[%81, %c0_42, %c0_43], %84 {strides = array<i32>} : memref<8x8x128xf32, #tpu.memory_space<vmem>>, vector<1x8x128xf32>,
    %c8_i32 = arith.constant 8 : i32
    %c0_44 = arith.constant 0 : index
    %c0_45 = arith.constant 0 : index
    %85 = vector.load %arg4[%c0_44, %c0_45] : memref<8x128xf32, #tpu.memory_space<vmem>>, vector<8x128xf32>
    tpu.vector_store %arg4[%c0_44, %c0_45], %80 {strides = array<i32>} : memref<8x128xf32, #tpu.memory_space<vmem>>, vector<8x128xf32>,
    return
  }
  func.func @transform_0(%arg0: i32) -> (i32, i32, i32) {
    %c0_i32 = arith.constant 0 : i32
    %c0_i32_0 = arith.constant 0 : i32
    %c0_i32_1 = arith.constant 0 : i32
    return %arg0, %c0_i32, %c0_i32_0 : i32, i32, i32
  }
  func.func @transform_1(%arg0: i32) -> (i32, i32) {
    %c0_i32 = arith.constant 0 : i32
    %c0_i32_0 = arith.constant 0 : i32
    %c0_i32_1 = arith.constant 0 : i32
    return %c0_i32, %c0_i32_0 : i32, i32
  }
  func.func @transform_2(%arg0: i32) -> (i32, i32, i32) {
    %c0_i32 = arith.constant 0 : i32
    %c0_i32_0 = arith.constant 0 : i32
    %c0_i32_1 = arith.constant 0 : i32
    return %arg0, %c0_i32, %c0_i32_0 : i32, i32, i32
  }
}

</mosaic_0001>

<llo_original>
// kernel: tpu_custom_call.1
$region0: #{tpu_custom_call.1}
  #allocation0 [shape = 'u32[]', space=smem, size = 0x4, offset = 0x4, fixed_abs, tag = 'smem constant byte address 0x4 - core index']
  #allocation1 [shape = 'u32[144,128]{1,0:T(1,128)}', space=vmem, size = 0x12000, scoped, tag = 'internal scratch']
  #allocation2 [shape = 'f32[8,128]{1,0:T(8,128)}', space=vmem, size = 0x1000, scoped, tag = 'scratch operand']
  %s0 = inlined_call_operand.hbm [shape: f32[8,8,128], index: 0, kind: input, shape index: {}]
  %s1 = inlined_call_operand.hbm [shape: f32[128,128], index: 1, kind: input, shape index: {}]
  %s2 = inlined_call_operand.hbm [shape: f32[8,8,128], index: 2, kind: output, shape index: {}]
  %s3 = sld [smem:[#allocation0]]
  $region30: #{tpu_custom_call.1} parent=0
    _
  %s5 = ssub.s32 1, %s3
  %s6 = scalar_select 0, %s5, %s3
  $region1: #{tpu_custom_call.1} parent=0
    #allocation3 [shape = 'u8[32768]{0}', space=vmem, size = 0x8000, scoped, tag = 'input window, operand 0, single buffered']
    #allocation4 [shape = 's32[1]{0}', space=sflag, size = 0x4, scoped, tag = 'scoped memory for tpu_custom_call.1']
    #allocation5 [shape = 's32[1]{0}', space=sflag, size = 0x4, scoped, tag = 'scoped memory for tpu_custom_call.1']
    #allocation6 [shape = 'u8[65536]{0}', space=vmem, size = 0x10000, scoped, tag = 'input window, operand 1, single buffered']
    #allocation7 [shape = 's32[1]{0}', space=sflag, size = 0x4, scoped, tag = 'scoped memory for tpu_custom_call.1']
    #allocation8 [shape = 'u8[32768]{0}', space=vmem, size = 0x8000, scoped, tag = 'output window, operand 0, single buffered']
    %7 = vsyncpa [#allocation4], 0
    %8 = vsyncpa [#allocation7], 0
    %9 = vsyncpa [#allocation5], 0
    // Predicated region
    $region2: #{tpu_custom_call.1} parent=1 // pred_check
      _
    $region3: #{tpu_custom_call.1} parent=1 // pred_check_branch
      %11 = sbr.rel (0) target = $region5
    $region4: #{tpu_custom_call.1} parent=1 // pred_region
      %s13 = ssub.s32 1024, 1024
      %14 = vsyncadd [#allocation4], %s13
      %s15 = sshll.u32 [#allocation3], 4
      %s16 = int_to_ptr.vmem [resolvable:$true] %s15
      %21 = dma.hbm_to_vmem [thread:$0]  %s0, 1024, %s16, [#allocation4], 128, 128, 8
    $region5: #{tpu_custom_call.1} parent=1 // pred_fallthru
      _
    // Predicated region
    $region6: #{tpu_custom_call.1} parent=1 // pred_check
      _
    $region7: #{tpu_custom_call.1} parent=1 // pred_check_branch
      %23 = sbr.rel (0) target = $region9
    $region8: #{tpu_custom_call.1} parent=1 // pred_region
      %s25 = ssub.s32 2048, 2048
      %26 = vsyncadd [#allocation7], %s25
      %s27 = sshll.u32 [#allocation6], 4
      %s28 = int_to_ptr.vmem [resolvable:$true] %s27
      %33 = dma.hbm_to_vmem [thread:$0]  %s1, 2048, %s28, [#allocation7], 128, 128, 8
    $region9: #{tpu_custom_call.1} parent=1 // pred_fallthru
      _
    // Predicated region
    $region10: #{tpu_custom_call.1} parent=1 // pred_check
      _
    $region11: #{tpu_custom_call.1} parent=1 // pred_check_branch
      %35 = sbr.rel (0) target = $region13
    $region12: #{tpu_custom_call.1} parent=1 // pred_region
      %36 = dma.done [#allocation4], 1024
    $region13: #{tpu_custom_call.1} parent=1 // pred_fallthru
      _
    // Predicated region
    $region14: #{tpu_custom_call.1} parent=1 // pred_check
      _
    $region15: #{tpu_custom_call.1} parent=1 // pred_check_branch
      %38 = sbr.rel (0) target = $region17
    $region16: #{tpu_custom_call.1} parent=1 // pred_region
      %39 = dma.done [#allocation7], 2048
    $region17: #{tpu_custom_call.1} parent=1 // pred_fallthru
      _
    %p40 = scmp.eq.s32.totalorder 0, 0
    // Predicated region
    $region18: #{tpu_custom_call.1} parent=1 // pred_check
      %p41 = pneg %p40
    $region19: #{tpu_custom_call.1} parent=1 // pred_check_branch
      %43 = sbr.rel (%p41) target = $region21
    $region20: #{tpu_custom_call.1} parent=1 // pred_region
      %44 = vst [vmem:[#allocation2] sm:$0xff] 0.0
    $region21: #{tpu_custom_call.1} parent=1 // pred_fallthru
      _
    %v45 = vld [vmem:[#allocation6] sm:$0xff]
    %v46 = vld [vmem:[#allocation6 + $0x8] sm:$0xff]
    %v47 = vld [vmem:[#allocation6 + $0x10] sm:$0xff]
    %v48 = vld [vmem:[#allocation6 + $0x18] sm:$0xff]
    %v49 = vld [vmem:[#allocation6 + $0x20] sm:$0xff]
    %v50 = vld [vmem:[#allocation6 + $0x28] sm:$0xff]
    %v51 = vld [vmem:[#allocation6 + $0x30] sm:$0xff]
    %v52 = vld [vmem:[#allocation6 + $0x38] sm:$0xff]
    %v53 = vld [vmem:[#allocation6 + $0x40] sm:$0xff]
    %v54 = vld [vmem:[#allocation6 + $0x48] sm:$0xff]
    %v55 = vld [vmem:[#allocation6 + $0x50] sm:$0xff]
    %v56 = vld [vmem:[#allocation6 + $0x58] sm:$0xff]
    %v57 = vld [vmem:[#allocation6 + $0x60] sm:$0xff]
    %v58 = vld [vmem:[#allocation6 + $0x68] sm:$0xff]
    %v59 = vld [vmem:[#allocation6 + $0x70] sm:$0xff]
    %v60 = vld [vmem:[#allocation6 + $0x78] sm:$0xff]
    %v61 = vld [vmem:[#allocation2] sm:$0xff]
    %v62 = vld [vmem:[#allocation3] sm:$0xff]
    %63 = vmatprep.subr.mxu0 0.0
    %64 = vmatpush1.msra.mxu0 %v45
    %65 = vmatprep.subr.mxu0 0.0
    %66 = vmatpush1.msra.mxu0 %v46
    %67 = vmatprep.subr.mxu0 0.0
    %68 = vmatpush1.msra.mxu0 %v47
    %69 = vmatprep.subr.mxu0 0.0
    %70 = vmatpush1.msra.mxu0 %v48
    %71 = vmatprep.subr.mxu0 0.0
    %72 = vmatpush1.msra.mxu0 %v49
    %73 = vmatprep.subr.mxu0 0.0
    %74 = vmatpush1.msra.mxu0 %v50
    %75 = vmatprep.subr.mxu0 0.0
    %76 = vmatpush1.msra.mxu0 %v51
    %77 = vmatprep.subr.mxu0 0.0
    %78 = vmatpush1.msra.mxu0 %v52
    %79 = vmatprep.subr.mxu0 0.0
    %80 = vmatpush1.msra.mxu0 %v53
    %81 = vmatprep.subr.mxu0 0.0
    %82 = vmatpush1.msra.mxu0 %v54
    %83 = vmatprep.subr.mxu0 0.0
    %84 = vmatpush1.msra.mxu0 %v55
    %85 = vmatprep.subr.mxu0 0.0
    %86 = vmatpush1.msra.mxu0 %v56
    %87 = vmatprep.subr.mxu0 0.0
    %88 = vmatpush1.msra.mxu0 %v57
    %89 = vmatprep.subr.mxu0 0.0
    %90 = vmatpush1.msra.mxu0 %v58
    %91 = vmatprep.subr.mxu0 0.0
    %92 = vmatpush1.msra.mxu0 %v59
    %93 = vmatprep.subr.mxu0 0.0
    %94 = vmatpush1.msra.mxu0 %v60
    %95 = vmatprep.subr.mxu0 0.0
    %96 = vmatpush1.msra.mxu0 0.0
    %97 = vmatprep.subr.mxu0 0.0
    %98 = vmatpush1.msra.mxu0 0.0
    %99 = vmatprep.subr.mxu0 0.0
    %100 = vmatpush1.msra.mxu0 0.0
    %101 = vmatprep.subr.mxu0 0.0
    %102 = vmatpush1.msra.mxu0 0.0
    %103 = vmatprep.subr.mxu0 0.0
    %104 = vmatpush1.msra.mxu0 0.0
    %105 = vmatprep.subr.mxu0 0.0
    %106 = vmatpush1.msra.mxu0 0.0
    %107 = vmatprep.subr.mxu0 0.0
    %108 = vmatpush1.msra.mxu0 0.0
    %109 = vmatprep.subr.mxu0 0.0
    %110 = vmatpush1.msra.mxu0 0.0
    %111 = vmatprep.subr.mxu0 0.0
    %112 = vmatpush1.msra.mxu0 0.0
    %113 = vmatprep.subr.mxu0 0.0
    %114 = vmatpush1.msra.mxu0 0.0
    %115 = vmatprep.subr.mxu0 0.0
    %116 = vmatpush1.msra.mxu0 0.0
    %117 = vmatprep.subr.mxu0 0.0
    %118 = vmatpush1.msra.mxu0 0.0
    %119 = vmatprep.subr.mxu0 0.0
    %120 = vmatpush1.msra.mxu0 0.0
    %121 = vmatprep.subr.mxu0 0.0
    %122 = vmatpush1.msra.mxu0 0.0
    %123 = vmatprep.subr.mxu0 0.0
    %124 = vmatpush1.msra.mxu0 0.0
    %125 = vmatprep.subr.mxu0 0.0
    %126 = vmatpush1.msra.mxu0 0.0
    %127 = vmatprep.mubr.f32.mxu0 0.0
    %128 = vmatmul.mubr.f32.gmra.mrb[0].mxu0 %v61
    %v129 = vpop.f32.mrb[0].mxu0
    %v130 = vadd.f32 0.0, %v129
    %v131 = vpop.f32.mrb[0].mxu0
    %132 = vdwg.mxu0
    %v133 = vadd.f32 %v62, %v130
    %v134 = vtanh.pop %v133
    %135 = vst [vmem:[#allocation8] sm:$0xff] %v134
    %s136 = scalar_lea.vmem [#allocation3], 8
    %v137 = vld [vmem:[%s136] sm:$0xff]
    %138 = vmatprep.subr.mxu0 0.0
    %139 = vmatpush1.msra.mxu0 %v45
    %140 = vmatprep.subr.mxu0 0.0
    %141 = vmatpush1.msra.mxu0 %v46
    %142 = vmatprep.subr.mxu0 0.0
    %143 = vmatpush1.msra.mxu0 %v47
    %144 = vmatprep.subr.mxu0 0.0
    %145 = vmatpush1.msra.mxu0 %v48
    %146 = vmatprep.subr.mxu0 0.0
    %147 = vmatpush1.msra.mxu0 %v49
    %148 = vmatprep.subr.mxu0 0.0
    %149 = vmatpush1.msra.mxu0 %v50
    %150 = vmatprep.subr.mxu0 0.0
    %151 = vmatpush1.msra.mxu0 %v51
    %152 = vmatprep.subr.mxu0 0.0
    %153 = vmatpush1.msra.mxu0 %v52
    %154 = vmatprep.subr.mxu0 0.0
    %155 = vmatpush1.msra.mxu0 %v53
    %156 = vmatprep.subr.mxu0 0.0
    %157 = vmatpush1.msra.mxu0 %v54
    %158 = vmatprep.subr.mxu0 0.0
    %159 = vmatpush1.msra.mxu0 %v55
    %160 = vmatprep.subr.mxu0 0.0
    %161 = vmatpush1.msra.mxu0 %v56
    %162 = vmatprep.subr.mxu0 0.0
    %163 = vmatpush1.msra.mxu0 %v57
    %164 = vmatprep.subr.mxu0 0.0
    %165 = vmatpush1.msra.mxu0 %v58
    %166 = vmatprep.subr.mxu0 0.0
    %167 = vmatpush1.msra.mxu0 %v59
    %168 = vmatprep.subr.mxu0 0.0
    %169 = vmatpush1.msra.mxu0 %v60
    %170 = vmatprep.subr.mxu0 0.0
    %171 = vmatpush1.msra.mxu0 0.0
    %172 = vmatprep.subr.mxu0 0.0
    %173 = vmatpush1.msra.mxu0 0.0
    %174 = vmatprep.subr.mxu0 0.0
    %175 = vmatpush1.msra.mxu0 0.0
    %176 = vmatprep.subr.mxu0 0.0
    %177 = vmatpush1.msra.mxu0 0.0
    %178 = vmatprep.subr.mxu0 0.0
    %179 = vmatpush1.msra.mxu0 0.0
    %180 = vmatprep.subr.mxu0 0.0
    %181 = vmatpush1.msra.mxu0 0.0
    %182 = vmatprep.subr.mxu0 0.0
    %183 = vmatpush1.msra.mxu0 0.0
    %184 = vmatprep.subr.mxu0 0.0
    %185 = vmatpush1.msra.mxu0 0.0
    %186 = vmatprep.subr.mxu0 0.0
    %187 = vmatpush1.msra.mxu0 0.0
    %188 = vmatprep.subr.mxu0 0.0
    %189 = vmatpush1.msra.mxu0 0.0
    %190 = vmatprep.subr.mxu0 0.0
    %191 = vmatpush1.msra.mxu0 0.0
    %192 = vmatprep.subr.mxu0 0.0
    %193 = vmatpush1.msra.mxu0 0.0
    %194 = vmatprep.subr.mxu0 0.0
    %195 = vmatpush1.msra.mxu0 0.0
    %196 = vmatprep.subr.mxu0 0.0
    %197 = vmatpush1.msra.mxu0 0.0
    %198 = vmatprep.subr.mxu0 0.0
    %199 = vmatpush1.msra.mxu0 0.0
    %200 = vmatprep.subr.mxu0 0.0
    %201 = vmatpush1.msra.mxu0 0.0
    %202 = vmatprep.mubr.f32.mxu0 0.0
    %203 = vmatmul.mubr.f32.gmra.mrb[0].mxu0 %v134
    %v204 = vpop.f32.mrb[0].mxu0
    %v205 = vadd.f32 0.0, %v204
    %v206 = vpop.f32.mrb[0].mxu0
    %207 = vdwg.mxu0
    %v208 = vadd.f32 %v137, %v205
    %v209 = vtanh.pop %v208
    %s210 = scalar_lea.vmem [#allocation8], 8
    %211 = vst [vmem:[%s210] sm:$0xff] %v209
    %s212 = scalar_lea.vmem [#allocation3], 16
    %v213 = vld [vmem:[%s212] sm:$0xff]
    %214 = vmatprep.subr.mxu0 0.0
    %215 = vmatpush1.msra.mxu0 %v45
    %216 = vmatprep.subr.mxu0 0.0
    %217 = vmatpush1.msra.mxu0 %v46
    %218 = vmatprep.subr.mxu0 0.0
    %219 = vmatpush1.msra.mxu0 %v47
    %220 = vmatprep.subr.mxu0 0.0
    %221 = vmatpush1.msra.mxu0 %v48
    %222 = vmatprep.subr.mxu0 0.0
    %223 = vmatpush1.msra.mxu0 %v49
    %224 = vmatprep.subr.mxu0 0.0
    %225 = vmatpush1.msra.mxu0 %v50
    %226 = vmatprep.subr.mxu0 0.0
    %227 = vmatpush1.msra.mxu0 %v51
    %228 = vmatprep.subr.mxu0 0.0
    %229 = vmatpush1.msra.mxu0 %v52
    %230 = vmatprep.subr.mxu0 0.0
    %231 = vmatpush1.msra.mxu0 %v53
    %232 = vmatprep.subr.mxu0 0.0
    %233 = vmatpush1.msra.mxu0 %v54
    %234 = vmatprep.subr.mxu0 0.0
    %235 = vmatpush1.msra.mxu0 %v55
    %236 = vmatprep.subr.mxu0 0.0
    %237 = vmatpush1.msra.mxu0 %v56
    %238 = vmatprep.subr.mxu0 0.0
    %239 = vmatpush1.msra.mxu0 %v57
    %240 = vmatprep.subr.mxu0 0.0
    %241 = vmatpush1.msra.mxu0 %v58
    %242 = vmatprep.subr.mxu0 0.0
    %243 = vmatpush1.msra.mxu0 %v59
    %244 = vmatprep.subr.mxu0 0.0
    %245 = vmatpush1.msra.mxu0 %v60
    %246 = vmatprep.subr.mxu0 0.0
    %247 = vmatpush1.msra.mxu0 0.0
    %248 = vmatprep.subr.mxu0 0.0
    %249 = vmatpush1.msra.mxu0 0.0
    %250 = vmatprep.subr.mxu0 0.0
    %251 = vmatpush1.msra.mxu0 0.0
    %252 = vmatprep.subr.mxu0 0.0
    %253 = vmatpush1.msra.mxu0 0.0
    %254 = vmatprep.subr.mxu0 0.0
    %255 = vmatpush1.msra.mxu0 0.0
    %256 = vmatprep.subr.mxu0 0.0
    %257 = vmatpush1.msra.mxu0 0.0
    %258 = vmatprep.subr.mxu0 0.0
    %259 = vmatpush1.msra.mxu0 0.0
    %260 = vmatprep.subr.mxu0 0.0
    %261 = vmatpush1.msra.mxu0 0.0
    %262 = vmatprep.subr.mxu0 0.0
    %263 = vmatpush1.msra.mxu0 0.0
    %264 = vmatprep.subr.mxu0 0.0
    %265 = vmatpush1.msra.mxu0 0.0
    %266 = vmatprep.subr.mxu0 0.0
    %267 = vmatpush1.msra.mxu0 0.0
    %268 = vmatprep.subr.mxu0 0.0
    %269 = vmatpush1.msra.mxu0 0.0
    %270 = vmatprep.subr.mxu0 0.0
    %271 = vmatpush1.msra.mxu0 0.0
    %272 = vmatprep.subr.mxu0 0.0
    %273 = vmatpush1.msra.mxu0 0.0
    %274 = vmatprep.subr.mxu0 0.0
    %275 = vmatpush1.msra.mxu0 0.0
    %276 = vmatprep.subr.mxu0 0.0
    %277 = vmatpush1.msra.mxu0 0.0
    %278 = vmatprep.mubr.f32.mxu0 0.0
    %279 = vmatmul.mubr.f32.gmra.mrb[0].mxu0 %v209
    %v280 = vpop.f32.mrb[0].mxu0
    %v281 = vadd.f32 0.0, %v280
    %v282 = vpop.f32.mrb[0].mxu0
    %283 = vdwg.mxu0
    %v284 = vadd.f32 %v213, %v281
    %v285 = vtanh.pop %v284
    %s286 = scalar_lea.vmem [#allocation8], 16
    %287 = vst [vmem:[%s286] sm:$0xff] %v285
    %s288 = scalar_lea.vmem [#allocation3], 24
    %v289 = vld [vmem:[%s288] sm:$0xff]
    %290 = vmatprep.subr.mxu0 0.0
    %291 = vmatpush1.msra.mxu0 %v45
    %292 = vmatprep.subr.mxu0 0.0
    %293 = vmatpush1.msra.mxu0 %v46
    %294 = vmatprep.subr.mxu0 0.0
    %295 = vmatpush1.msra.mxu0 %v47
    %296 = vmatprep.subr.mxu0 0.0
    %297 = vmatpush1.msra.mxu0 %v48
    %298 = vmatprep.subr.mxu0 0.0
    %299 = vmatpush1.msra.mxu0 %v49
    %300 = vmatprep.subr.mxu0 0.0
    %301 = vmatpush1.msra.mxu0 %v50
    %302 = vmatprep.subr.mxu0 0.0
    %303 = vmatpush1.msra.mxu0 %v51
    %304 = vmatprep.subr.mxu0 0.0
    %305 = vmatpush1.msra.mxu0 %v52
    %306 = vmatprep.subr.mxu0 0.0
    %307 = vmatpush1.msra.mxu0 %v53
    %308 = vmatprep.subr.mxu0 0.0
    %309 = vmatpush1.msra.mxu0 %v54
    %310 = vmatprep.subr.mxu0 0.0
    %311 = vmatpush1.msra.mxu0 %v55
    %312 = vmatprep.subr.mxu0 0.0
    %313 = vmatpush1.msra.mxu0 %v56
    %314 = vmatprep.subr.mxu0 0.0
    %315 = vmatpush1.msra.mxu0 %v57
    %316 = vmatprep.subr.mxu0 0.0
    %317 = vmatpush1.msra.mxu0 %v58
    %318 = vmatprep.subr.mxu0 0.0
    %319 = vmatpush1.msra.mxu0 %v59
    %320 = vmatprep.subr.mxu0 0.0
    %321 = vmatpush1.msra.mxu0 %v60
    %322 = vmatprep.subr.mxu0 0.0
    %323 = vmatpush1.msra.mxu0 0.0
    %324 = vmatprep.subr.mxu0 0.0
    %325 = vmatpush1.msra.mxu0 0.0
    %326 = vmatprep.subr.mxu0 0.0
    %327 = vmatpush1.msra.mxu0 0.0
    %328 = vmatprep.subr.mxu0 0.0
    %329 = vmatpush1.msra.mxu0 0.0
    %330 = vmatprep.subr.mxu0 0.0
    %331 = vmatpush1.msra.mxu0 0.0
    %332 = vmatprep.subr.mxu0 0.0
    %333 = vmatpush1.msra.mxu0 0.0
    %334 = vmatprep.subr.mxu0 0.0
    %335 = vmatpush1.msra.mxu0 0.0
    %336 = vmatprep.subr.mxu0 0.0
    %337 = vmatpush1.msra.mxu0 0.0
    %338 = vmatprep.subr.mxu0 0.0
    %339 = vmatpush1.msra.mxu0 0.0
    %340 = vmatprep.subr.mxu0 0.0
    %341 = vmatpush1.msra.mxu0 0.0
    %342 = vmatprep.subr.mxu0 0.0
    %343 = vmatpush1.msra.mxu0 0.0
    %344 = vmatprep.subr.mxu0 0.0
    %345 = vmatpush1.msra.mxu0 0.0
    %346 = vmatprep.subr.mxu0 0.0
    %347 = vmatpush1.msra.mxu0 0.0
    %348 = vmatprep.subr.mxu0 0.0
    %349 = vmatpush1.msra.mxu0 0.0
    %350 = vmatprep.subr.mxu0 0.0
    %351 = vmatpush1.msra.mxu0 0.0
    %352 = vmatprep.subr.mxu0 0.0
    %353 = vmatpush1.msra.mxu0 0.0
    %354 = vmatprep.mubr.f32.mxu0 0.0
    %355 = vmatmul.mubr.f32.gmra.mrb[0].mxu0 %v285
    %v356 = vpop.f32.mrb[0].mxu0
    %v357 = vadd.f32 0.0, %v356
    %v358 = vpop.f32.mrb[0].mxu0
    %359 = vdwg.mxu0
    %v360 = vadd.f32 %v289, %v357
    %v361 = vtanh.pop %v360
    %s362 = scalar_lea.vmem [#allocation8], 24
    %363 = vst [vmem:[%s362] sm:$0xff] %v361
    %s364 = scalar_lea.vmem [#allocation3], 32
    %v365 = vld [vmem:[%s364] sm:$0xff]
    %366 = vmatprep.subr.mxu0 0.0
    %367 = vmatpush1.msra.mxu0 %v45
    %368 = vmatprep.subr.mxu0 0.0
    %369 = vmatpush1.msra.mxu0 %v46
    %370 = vmatprep.subr.mxu0 0.0
    %371 = vmatpush1.msra.mxu0 %v47
    %372 = vmatprep.subr.mxu0 0.0
    %373 = vmatpush1.msra.mxu0 %v48
    %374 = vmatprep.subr.mxu0 0.0
    %375 = vmatpush1.msra.mxu0 %v49
    %376 = vmatprep.subr.mxu0 0.0
    %377 = vmatpush1.msra.mxu0 %v50
    %378 = vmatprep.subr.mxu0 0.0
    %379 = vmatpush1.msra.mxu0 %v51
    %380 = vmatprep.subr.mxu0 0.0
    %381 = vmatpush1.msra.mxu0 %v52
    %382 = vmatprep.subr.mxu0 0.0
    %383 = vmatpush1.msra.mxu0 %v53
    %384 = vmatprep.subr.mxu0 0.0
    %385 = vmatpush1.msra.mxu0 %v54
    %386 = vmatprep.subr.mxu0 0.0
    %387 = vmatpush1.msra.mxu0 %v55
    %388 = vmatprep.subr.mxu0 0.0
    %389 = vmatpush1.msra.mxu0 %v56
    %390 = vmatprep.subr.mxu0 0.0
    %391 = vmatpush1.msra.mxu0 %v57
    %392 = vmatprep.subr.mxu0 0.0
    %393 = vmatpush1.msra.mxu0 %v58
    %394 = vmatprep.subr.mxu0 0.0
    %395 = vmatpush1.msra.mxu0 %v59
    %396 = vmatprep.subr.mxu0 0.0
    %397 = vmatpush1.msra.mxu0 %v60
    %398 = vmatprep.subr.mxu0 0.0
    %399 = vmatpush1.msra.mxu0 0.0
    %400 = vmatprep.subr.mxu0 0.0
    %401 = vmatpush1.msra.mxu0 0.0
    %402 = vmatprep.subr.mxu0 0.0
    %403 = vmatpush1.msra.mxu0 0.0
    %404 = vmatprep.subr.mxu0 0.0
    %405 = vmatpush1.msra.mxu0 0.0
    %406 = vmatprep.subr.mxu0 0.0
    %407 = vmatpush1.msra.mxu0 0.0
    %408 = vmatprep.subr.mxu0 0.0
    %409 = vmatpush1.msra.mxu0 0.0
    %410 = vmatprep.subr.mxu0 0.0
    %411 = vmatpush1.msra.mxu0 0.0
    %412 = vmatprep.subr.mxu0 0.0
    %413 = vmatpush1.msra.mxu0 0.0
    %414 = vmatprep.subr.mxu0 0.0
    %415 = vmatpush1.msra.mxu0 0.0
    %416 = vmatprep.subr.mxu0 0.0
    %417 = vmatpush1.msra.mxu0 0.0
    %418 = vmatprep.subr.mxu0 0.0
    %419 = vmatpush1.msra.mxu0 0.0
    %420 = vmatprep.subr.mxu0 0.0
    %421 = vmatpush1.msra.mxu0 0.0
    %422 = vmatprep.subr.mxu0 0.0
    %423 = vmatpush1.msra.mxu0 0.0
    %424 = vmatprep.subr.mxu0 0.0
    %425 = vmatpush1.msra.mxu0 0.0
    %426 = vmatprep.subr.mxu0 0.0
    %427 = vmatpush1.msra.mxu0 0.0
    %428 = vmatprep.subr.mxu0 0.0
    %429 = vmatpush1.msra.mxu0 0.0
    %430 = vmatprep.mubr.f32.mxu0 0.0
    %431 = vmatmul.mubr.f32.gmra.mrb[0].mxu0 %v361
    %v432 = vpop.f32.mrb[0].mxu0
    %v433 = vadd.f32 0.0, %v432
    %v434 = vpop.f32.mrb[0].mxu0
    %435 = vdwg.mxu0
    %v436 = vadd.f32 %v365, %v433
    %v437 = vtanh.pop %v436
    %s438 = scalar_lea.vmem [#allocation8], 32
    %439 = vst [vmem:[%s438] sm:$0xff] %v437
    %s440 = scalar_lea.vmem [#allocation3], 40
    %v441 = vld [vmem:[%s440] sm:$0xff]
    %442 = vmatprep.subr.mxu0 0.0
    %443 = vmatpush1.msra.mxu0 %v45
    %444 = vmatprep.subr.mxu0 0.0
    %445 = vmatpush1.msra.mxu0 %v46
    %446 = vmatprep.subr.mxu0 0.0
    %447 = vmatpush1.msra.mxu0 %v47
    %448 = vmatprep.subr.mxu0 0.0
    %449 = vmatpush1.msra.mxu0 %v48
    %450 = vmatprep.subr.mxu0 0.0
    %451 = vmatpush1.msra.mxu0 %v49
    %452 = vmatprep.subr.mxu0 0.0
    %453 = vmatpush1.msra.mxu0 %v50
    %454 = vmatprep.subr.mxu0 0.0
    %455 = vmatpush1.msra.mxu0 %v51
    %456 = vmatprep.subr.mxu0 0.0
    %457 = vmatpush1.msra.mxu0 %v52
    %458 = vmatprep.subr.mxu0 0.0
    %459 = vmatpush1.msra.mxu0 %v53
    %460 = vmatprep.subr.mxu0 0.0
    %461 = vmatpush1.msra.mxu0 %v54
    %462 = vmatprep.subr.mxu0 0.0
    %463 = vmatpush1.msra.mxu0 %v55
    %464 = vmatprep.subr.mxu0 0.0
    %465 = vmatpush1.msra.mxu0 %v56
    %466 = vmatprep.subr.mxu0 0.0
    %467 = vmatpush1.msra.mxu0 %v57
    %468 = vmatprep.subr.mxu0 0.0
    %469 = vmatpush1.msra.mxu0 %v58
    %470 = vmatprep.subr.mxu0 0.0
    %471 = vmatpush1.msra.mxu0 %v59
    %472 = vmatprep.subr.mxu0 0.0
    %473 = vmatpush1.msra.mxu0 %v60
    %474 = vmatprep.subr.mxu0 0.0
    %475 = vmatpush1.msra.mxu0 0.0
    %476 = vmatprep.subr.mxu0 0.0
    %477 = vmatpush1.msra.mxu0 0.0
    %478 = vmatprep.subr.mxu0 0.0
    %479 = vmatpush1.msra.mxu0 0.0
    %480 = vmatprep.subr.mxu0 0.0
    %481 = vmatpush1.msra.mxu0 0.0
    %482 = vmatprep.subr.mxu0 0.0
    %483 = vmatpush1.msra.mxu0 0.0
    %484 = vmatprep.subr.mxu0 0.0
    %485 = vmatpush1.msra.mxu0 0.0
    %486 = vmatprep.subr.mxu0 0.0
    %487 = vmatpush1.msra.mxu0 0.0
    %488 = vmatprep.subr.mxu0 0.0
    %489 = vmatpush1.msra.mxu0 0.0
    %490 = vmatprep.subr.mxu0 0.0
    %491 = vmatpush1.msra.mxu0 0.0
    %492 = vmatprep.subr.mxu0 0.0
    %493 = vmatpush1.msra.mxu0 0.0
    %494 = vmatprep.subr.mxu0 0.0
    %495 = vmatpush1.msra.mxu0 0.0
    %496 = vmatprep.subr.mxu0 0.0
    %497 = vmatpush1.msra.mxu0 0.0
    %498 = vmatprep.subr.mxu0 0.0
    %499 = vmatpush1.msra.mxu0 0.0
    %500 = vmatprep.subr.mxu0 0.0
    %501 = vmatpush1.msra.mxu0 0.0
    %502 = vmatprep.subr.mxu0 0.0
    %503 = vmatpush1.msra.mxu0 0.0
    %504 = vmatprep.subr.mxu0 0.0
    %505 = vmatpush1.msra.mxu0 0.0
    %506 = vmatprep.mubr.f32.mxu0 0.0
    %507 = vmatmul.mubr.f32.gmra.mrb[0].mxu0 %v437
    %v508 = vpop.f32.mrb[0].mxu0
    %v509 = vadd.f32 0.0, %v508
    %v510 = vpop.f32.mrb[0].mxu0
    %511 = vdwg.mxu0
    %v512 = vadd.f32 %v441, %v509
    %v513 = vtanh.pop %v512
    %s514 = scalar_lea.vmem [#allocation8], 40
    %515 = vst [vmem:[%s514] sm:$0xff] %v513
    %s516 = scalar_lea.vmem [#allocation3], 48
    %v517 = vld [vmem:[%s516] sm:$0xff]
    %518 = vmatprep.subr.mxu0 0.0
    %519 = vmatpush1.msra.mxu0 %v45
    %520 = vmatprep.subr.mxu0 0.0
    %521 = vmatpush1.msra.mxu0 %v46
    %522 = vmatprep.subr.mxu0 0.0
    %523 = vmatpush1.msra.mxu0 %v47
    %524 = vmatprep.subr.mxu0 0.0
    %525 = vmatpush1.msra.mxu0 %v48
    %526 = vmatprep.subr.mxu0 0.0
    %527 = vmatpush1.msra.mxu0 %v49
    %528 = vmatprep.subr.mxu0 0.0
    %529 = vmatpush1.msra.mxu0 %v50
    %530 = vmatprep.subr.mxu0 0.0
    %531 = vmatpush1.msra.mxu0 %v51
    %532 = vmatprep.subr.mxu0 0.0
    %533 = vmatpush1.msra.mxu0 %v52
    %534 = vmatprep.subr.mxu0 0.0
    %535 = vmatpush1.msra.mxu0 %v53
    %536 = vmatprep.subr.mxu0 0.0
    %537 = vmatpush1.msra.mxu0 %v54
    %538 = vmatprep.subr.mxu0 0.0
    %539 = vmatpush1.msra.mxu0 %v55
    %540 = vmatprep.subr.mxu0 0.0
    %541 = vmatpush1.msra.mxu0 %v56
    %542 = vmatprep.subr.mxu0 0.0
    %543 = vmatpush1.msra.mxu0 %v57
    %544 = vmatprep.subr.mxu0 0.0
    %545 = vmatpush1.msra.mxu0 %v58
    %546 = vmatprep.subr.mxu0 0.0
    %547 = vmatpush1.msra.mxu0 %v59
    %548 = vmatprep.subr.mxu0 0.0
    %549 = vmatpush1.msra.mxu0 %v60
    %550 = vmatprep.subr.mxu0 0.0
    %551 = vmatpush1.msra.mxu0 0.0
    %552 = vmatprep.subr.mxu0 0.0
    %553 = vmatpush1.msra.mxu0 0.0
    %554 = vmatprep.subr.mxu0 0.0
    %555 = vmatpush1.msra.mxu0 0.0
    %556 = vmatprep.subr.mxu0 0.0
    %557 = vmatpush1.msra.mxu0 0.0
    %558 = vmatprep.subr.mxu0 0.0
    %559 = vmatpush1.msra.mxu0 0.0
    %560 = vmatprep.subr.mxu0 0.0
    %561 = vmatpush1.msra.mxu0 0.0
    %562 = vmatprep.subr.mxu0 0.0
    %563 = vmatpush1.msra.mxu0 0.0
    %564 = vmatprep.subr.mxu0 0.0
    %565 = vmatpush1.msra.mxu0 0.0
    %566 = vmatprep.subr.mxu0 0.0
    %567 = vmatpush1.msra.mxu0 0.0
    %568 = vmatprep.subr.mxu0 0.0
    %569 = vmatpush1.msra.mxu0 0.0
    %570 = vmatprep.subr.mxu0 0.0
    %571 = vmatpush1.msra.mxu0 0.0
    %572 = vmatprep.subr.mxu0 0.0
    %573 = vmatpush1.msra.mxu0 0.0
    %574 = vmatprep.subr.mxu0 0.0
    %575 = vmatpush1.msra.mxu0 0.0
    %576 = vmatprep.subr.mxu0 0.0
    %577 = vmatpush1.msra.mxu0 0.0
    %578 = vmatprep.subr.mxu0 0.0
    %579 = vmatpush1.msra.mxu0 0.0
    %580 = vmatprep.subr.mxu0 0.0
    %581 = vmatpush1.msra.mxu0 0.0
    %582 = vmatprep.mubr.f32.mxu0 0.0
    %583 = vmatmul.mubr.f32.gmra.mrb[0].mxu0 %v513
    %v584 = vpop.f32.mrb[0].mxu0
    %v585 = vadd.f32 0.0, %v584
    %v586 = vpop.f32.mrb[0].mxu0
    %587 = vdwg.mxu0
    %v588 = vadd.f32 %v517, %v585
    %v589 = vtanh.pop %v588
    %s590 = scalar_lea.vmem [#allocation8], 48
    %591 = vst [vmem:[%s590] sm:$0xff] %v589
    %s592 = scalar_lea.vmem [#allocation3], 56
    %v593 = vld [vmem:[%s592] sm:$0xff]
    %594 = vmatprep.subr.mxu0 0.0
    %595 = vmatpush1.msra.mxu0 %v45
    %596 = vmatprep.subr.mxu0 0.0
    %597 = vmatpush1.msra.mxu0 %v46
    %598 = vmatprep.subr.mxu0 0.0
    %599 = vmatpush1.msra.mxu0 %v47
    %600 = vmatprep.subr.mxu0 0.0
    %601 = vmatpush1.msra.mxu0 %v48
    %602 = vmatprep.subr.mxu0 0.0
    %603 = vmatpush1.msra.mxu0 %v49
    %604 = vmatprep.subr.mxu0 0.0
    %605 = vmatpush1.msra.mxu0 %v50
    %606 = vmatprep.subr.mxu0 0.0
    %607 = vmatpush1.msra.mxu0 %v51
    %608 = vmatprep.subr.mxu0 0.0
    %609 = vmatpush1.msra.mxu0 %v52
    %610 = vmatprep.subr.mxu0 0.0
    %611 = vmatpush1.msra.mxu0 %v53
    %612 = vmatprep.subr.mxu0 0.0
    %613 = vmatpush1.msra.mxu0 %v54
    %614 = vmatprep.subr.mxu0 0.0
    %615 = vmatpush1.msra.mxu0 %v55
    %616 = vmatprep.subr.mxu0 0.0
    %617 = vmatpush1.msra.mxu0 %v56
    %618 = vmatprep.subr.mxu0 0.0
    %619 = vmatpush1.msra.mxu0 %v57
    %620 = vmatprep.subr.mxu0 0.0
    %621 = vmatpush1.msra.mxu0 %v58
    %622 = vmatprep.subr.mxu0 0.0
    %623 = vmatpush1.msra.mxu0 %v59
    %624 = vmatprep.subr.mxu0 0.0
    %625 = vmatpush1.msra.mxu0 %v60
    %626 = vmatprep.subr.mxu0 0.0
    %627 = vmatpush1.msra.mxu0 0.0
    %628 = vmatprep.subr.mxu0 0.0
    %629 = vmatpush1.msra.mxu0 0.0
    %630 = vmatprep.subr.mxu0 0.0
    %631 = vmatpush1.msra.mxu0 0.0
    %632 = vmatprep.subr.mxu0 0.0
    %633 = vmatpush1.msra.mxu0 0.0
    %634 = vmatprep.subr.mxu0 0.0
    %635 = vmatpush1.msra.mxu0 0.0
    %636 = vmatprep.subr.mxu0 0.0
    %637 = vmatpush1.msra.mxu0 0.0
    %638 = vmatprep.subr.mxu0 0.0
    %639 = vmatpush1.msra.mxu0 0.0
    %640 = vmatprep.subr.mxu0 0.0
    %641 = vmatpush1.msra.mxu0 0.0
    %642 = vmatprep.subr.mxu0 0.0
    %643 = vmatpush1.msra.mxu0 0.0
    %644 = vmatprep.subr.mxu0 0.0
    %645 = vmatpush1.msra.mxu0 0.0
    %646 = vmatprep.subr.mxu0 0.0
    %647 = vmatpush1.msra.mxu0 0.0
    %648 = vmatprep.subr.mxu0 0.0
    %649 = vmatpush1.msra.mxu0 0.0
    %650 = vmatprep.subr.mxu0 0.0
    %651 = vmatpush1.msra.mxu0 0.0
    %652 = vmatprep.subr.mxu0 0.0
    %653 = vmatpush1.msra.mxu0 0.0
    %654 = vmatprep.subr.mxu0 0.0
    %655 = vmatpush1.msra.mxu0 0.0
    %656 = vmatprep.subr.mxu0 0.0
    %657 = vmatpush1.msra.mxu0 0.0
    %658 = vmatprep.mubr.f32.mxu0 0.0
    %659 = vmatmul.mubr.f32.gmra.mrb[0].mxu0 %v589
    %v660 = vpop.f32.mrb[0].mxu0
    %v661 = vadd.f32 0.0, %v660
    %v662 = vpop.f32.mrb[0].mxu0
    %663 = vdwg.mxu0
    %v664 = vadd.f32 %v593, %v661
    %v665 = vtanh.pop %v664
    %s666 = scalar_lea.vmem [#allocation8], 56
    %667 = vst [vmem:[%s666] sm:$0xff] %v665
    %668 = vst [vmem:[#allocation2] sm:$0xff] %v665
    // Predicated region
    $region22: #{tpu_custom_call.1} parent=1 // pred_check
      _
    $region23: #{tpu_custom_call.1} parent=1 // pred_check_branch
      %670 = sbr.rel (0) target = $region25
    $region24: #{tpu_custom_call.1} parent=1 // pred_region
      %s672 = ssub.s32 1024, 1024
      %673 = vsyncadd [#allocation5], %s672
      %s674 = sshll.u32 [#allocation8], 4
      %s675 = int_to_ptr.vmem [resolvable:$true] %s674
      %680 = dma.vmem_to_hbm [thread:$0]  %s675, 1024, %s2, [#allocation5], 128, 128, 8
    $region25: #{tpu_custom_call.1} parent=1 // pred_fallthru
      _
    // Predicated region
    $region26: #{tpu_custom_call.1} parent=1 // pred_check
      _
    $region27: #{tpu_custom_call.1} parent=1 // pred_check_branch
      %682 = sbr.rel (0) target = $region29
    $region28: #{tpu_custom_call.1} parent=1 // pred_region
      %683 = dma.done [#allocation5], 1024
    $region29: #{tpu_custom_call.1} parent=1 // pred_fallthru
      _
    %684 = vsyncpa [#allocation4], 1
    %685 = vsyncpa [#allocation7], 1
    %686 = vsyncpa [#allocation5], 1

</llo_original>
